<compile_context>
chip_gen: v5e
topology: v5e:2x2
jax: 0.10.0
libtpu: 0.0.40
codegen_flags: <defaults>
</compile_context>

<pallas_src>
import math

import jax
import jax.numpy as jnp
from jax.experimental import pallas as pl
from jax.experimental.pallas import tpu as pltpu


_TARGET_BLOCK_BYTES = 4 * 1024 * 1024   # ~4 MiB/block; <=4 live buffers -> <=16 MiB VMEM
_VMEM_LIMIT_BYTES = 32 * 1024 * 1024    # safe on v5e (raises 16 MiB default), v6e, v7x


def _copy_kernel(x_ref, o_ref):
    # Identity copy of one lane/sublane-dense (TR, L) block.
    o_ref[...] = x_ref[...]


def _choose_slab(total: int):
    """Pick a dense 2D slab (R, L) with R * L == total, L % 128 == 0, R % 8 == 0."""
    for L in (2048, 1024, 512, 256, 128):
        if total % L:
            continue
        R = total // L
        if R % 8 == 0:
            return R, L
    return None


def _choose_row_block(R: int, L: int, itemsize: int) -> int:
    """Largest multiple-of-8 divisor of R whose block fits the byte budget."""
    max_rows = max(8, (_TARGET_BLOCK_BYTES // (L * itemsize)) // 8 * 8)
    divs8 = [t for t in range(8, R + 1, 8) if R % t == 0]
    # Prefer >= 2 grid steps so both v7x TensorCores get work when possible.
    pref = [t for t in divs8 if t <= max_rows and t <= R // 2]
    if pref:
        return max(pref)
    ok = [t for t in divs8 if t <= max_rows]
    return max(ok) if ok else 8


@jax.jit
def _flatten_materialize(x: jax.Array) -> jax.Array:
    """Materializing copy of the flattened tensor via a Pallas kernel."""
    n = x.shape[0]
    d = math.prod(x.shape[1:]) if x.ndim > 1 else 1
    total = n * d
    itemsize = jnp.dtype(x.dtype).itemsize

    slab = _choose_slab(total)
    if slab is None:
        # Not densely tileable -> the (always-correct) metadata reshape.
        return jnp.reshape(x, (n, d))

    R, L = slab
    tr = _choose_row_block(R, L, itemsize)
    grid = (R // tr,)

    # Row-major collapse to a lane/sublane-dense slab (pure metadata; no data
    # is reordered, since the flattened order is the same row-major order).
    x_slab = jnp.reshape(x, (R, L))

    out = pl.pallas_call(
        _copy_kernel,
        out_shape=jax.ShapeDtypeStruct((R, L), x.dtype),
        grid_spec=pltpu.PrefetchScalarGridSpec(
            num_scalar_prefetch=0,
            grid=grid,
            in_specs=[pl.BlockSpec((tr, L), lambda i: (i, 0))],
            out_specs=pl.BlockSpec((tr, L), lambda i: (i, 0)),
        ),
        compiler_params=pltpu.CompilerParams(
            dimension_semantics=("parallel",),
            vmem_limit_bytes=_VMEM_LIMIT_BYTES,
        ),
        input_output_aliases={0: 0},
    )(x_slab)

    return jnp.reshape(out, (n, d))


def flatten_forward(x: jax.Array, materialize: bool = False) -> jax.Array:
    """Pallas equivalent of `input.view(input.size(0), -1)`.

    Default (materialize=False): metadata-only reshape — flatten needs no data
    movement, so launching a kernel would only add a full HBM round trip.
    materialize=True: force an explicit HBM materialization via the Pallas
    copy kernel (dense blocking, large tiles, aliased output buffer).
    """
    n = x.shape[0]
    d = math.prod(x.shape[1:]) if x.ndim > 1 else 1
    if not materialize:
        return jnp.reshape(x, (n, d))
    return _flatten_materialize(x)


if __name__ == "__main__":
    key = jax.random.PRNGKey(0)
    # Small NCHW activation: batch=2, channels=4, spatial=16x16.
    x = jax.random.normal(key, (2, 4, 16, 16), dtype=jnp.float32)

    # Reference semantics (torch .view == row-major reshape for contiguous NCHW).
    ref = jnp.reshape(x, (x.shape[0], -1))

    # Recommended zero-copy path.
    y_view = flatten_forward(x)
    y_view = jax.block_until_ready(y_view)

    # Pallas materializing copy path (run the kernel once).
    y_kernel = flatten_forward(x, materialize=True)
    y_kernel = jax.block_until_ready(y_kernel)

    assert y_view.shape == (2, 4 * 16 * 16), y_view.shape
    assert y_kernel.shape == (2, 4 * 16 * 16), y_kernel.shape
    assert y_kernel.dtype == x.dtype
    assert bool(jnp.array_equal(y_view, ref))
    assert bool(jnp.array_equal(y_kernel, ref))

    print("KERNEL_OK")
</pallas_src>

<mosaic_0001>
module attributes {stable_mosaic.version = 11 : i64} {
  func.func @_copy_kernel(%arg0: i32, %arg1: memref<8x256xf32, #tpu.memory_space<vmem>>, %arg2: memref<8x256xf32, #tpu.memory_space<vmem>>) attributes {dimension_semantics = [#tpu.dimension_semantics<parallel>], iteration_bounds = array<i64: 1>, scalar_prefetch = 0 : i64, scratch_operands = 0 : i64, tpu.core_type = #tpu.core_type<tc>, window_params = [{transform_indices = @transform_0, window_bounds = array<i64: 8, 256>}, {transform_indices = @transform_1, window_bounds = array<i64: 8, 256>}]} {
    %c0 = arith.constant 0 : index
    %c0_0 = arith.constant 0 : index
    %0 = vector.load %arg1[%c0, %c0_0] : memref<8x256xf32, #tpu.memory_space<vmem>>, vector<8x256xf32>
    %c0_1 = arith.constant 0 : index
    %c0_2 = arith.constant 0 : index
    %1 = vector.load %arg2[%c0_1, %c0_2] : memref<8x256xf32, #tpu.memory_space<vmem>>, vector<8x256xf32>
    tpu.vector_store %arg2[%c0_1, %c0_2], %0 {strides = array<i32>} : memref<8x256xf32, #tpu.memory_space<vmem>>, vector<8x256xf32>,
    return
  }
  func.func @transform_0(%arg0: i32) -> (i32, i32) {
    %c0_i32 = arith.constant 0 : i32
    %c0_i32_0 = arith.constant 0 : i32
    return %arg0, %c0_i32 : i32, i32
  }
  func.func @transform_1(%arg0: i32) -> (i32, i32) {
    %c0_i32 = arith.constant 0 : i32
    %c0_i32_0 = arith.constant 0 : i32
    return %arg0, %c0_i32 : i32, i32
  }
}

</mosaic_0001>

<llo_original>
// kernel: _flatten_materialize.1
$region0: #{_flatten_materialize.1}
  #allocation0 [shape = 'u32[]', space=smem, size = 0x4, offset = 0x4, fixed_abs, tag = 'smem constant byte address 0x4 - core index']
  #allocation1 [shape = 'u32[72,128]{1,0:T(1,128)}', space=vmem, size = 0x9000, scoped, tag = 'internal scratch']
  %s0 = inlined_call_operand.vmem [shape: f32[8,256], index: 0, kind: input, shape index: {}, may-alias: {0,1}]
  %s1 = inlined_call_operand.vmem [shape: f32[8,256], index: 1, kind: output, shape index: {}, may-alias: {0,1}]
  %s2 = sld [smem:[#allocation0]]
  $region14: #{_flatten_materialize.1} parent=0
    _
  %s4 = ssub.s32 1, %s2
  %s5 = scalar_select 0, %s4, %s2
  // Predicated region
  $region2: #{_flatten_materialize.1} parent=0 // pred_check
    _
  $region3: #{_flatten_materialize.1} parent=0 // pred_check_branch
    %7 = sbr.rel (0) target = $region5
  $region4: #{_flatten_materialize.1} parent=0 // pred_region
    _
  $region5: #{_flatten_materialize.1} parent=0 // pred_fallthru
    _
  %v8 = vld [vmem:[%s0] sm:$0xff]
  %v9 = vld [vmem:[%s0 + $0x8] sm:$0xff]
  %10 = vst [vmem:[%s1] sm:$0xff] %v8
  %11 = vst [vmem:[%s1 + $0x8] sm:$0xff] %v9
  // Predicated region
  $region6: #{_flatten_materialize.1} parent=0 // pred_check
    _
  $region7: #{_flatten_materialize.1} parent=0 // pred_check_branch
    %13 = sbr.rel (0) target = $region9
  $region8: #{_flatten_materialize.1} parent=0 // pred_region
    _
  $region9: #{_flatten_materialize.1} parent=0 // pred_fallthru
    _
  // Predicated region
  $region10: #{_flatten_materialize.1} parent=0 // pred_check
    _
  $region11: #{_flatten_materialize.1} parent=0 // pred_check_branch
    %15 = sbr.rel (0) target = $region13
  $region12: #{_flatten_materialize.1} parent=0 // pred_region
    _
  $region13: #{_flatten_materialize.1} parent=0 // pred_fallthru
    _

</llo_original>
